<compile_context>
chip_gen: v6e
topology: v6e:2x2x1
jax: 0.10.0
libtpu: 0.0.40
codegen_flags: <defaults>
</compile_context>

<pallas_src>
import jax
import jax.numpy as jnp
from jax.experimental import pallas as pl
from jax.experimental.pallas import tpu as pltpu


_OUT_TRUE = 11     # real fc3 out_features
_OUT_PAD_SUB = 16  # fc3 rows padded to a sublane multiple (extra rows are zero)
_LANE = 128        # TPU lane width


def _round_up(n, m):
    return ((n + m - 1) // m) * m


def _cdiv(a, b):
    return -(-a // b)


def _policy_net_kernel(x_ref, w1_ref, b1_ref, w2_ref, b2_ref, w3_ref, b3_ref, o_ref):
    x = x_ref[...]                                               # (2, tb)

    # fc1 (K=2): two VPU broadcast FMAs — skip the MXU entirely for this layer.
    h1 = (w1_ref[:, 0:1] * x[0:1, :]
          + w1_ref[:, 1:2] * x[1:2, :]
          + b1_ref[...])                                         # (24, tb)
    h1 = jnp.maximum(h1, 0.0)                                    # ReLU

    h2 = jnp.dot(w2_ref[...], h1, preferred_element_type=jnp.float32) + b2_ref[...]
    h2 = jnp.maximum(h2, 0.0)                                    # (48, tb), ReLU

    h3 = jnp.dot(w3_ref[...], h2, preferred_element_type=jnp.float32) + b3_ref[...]
    o_ref[...] = h3.astype(o_ref.dtype)                          # (16, tb), lane-dense


def _xla_forward(x, params):
    """Plain-XLA path (also serves as the numerical reference)."""
    h = jnp.maximum(x @ params["w1"].T + params["b1"].T, 0.0)
    h = jnp.maximum(h @ params["w2"].T + params["b2"].T, 0.0)
    y = x = h @ params["w3"].T + params["b3"].T
    return y[:, :_OUT_TRUE]


def policy_net_forward(x, params, *, tile_b=4096, min_kernel_batch=64):
    """x: (B, 2) float32.  params from init_params (feature-major, fc3 pre-padded).

    Returns (B, 11), matching PolicyNet.forward.
    """
    B = x.shape[0]

    # Tiny batches: pallas_call launch + pipeline setup dominates — use plain XLA.
    if B < min_kernel_batch:
        return _xla_forward(x, params)

    w1, b1, w2, b2, w3, b3 = (params[k] for k in ("w1", "b1", "w2", "b2", "w3", "b3"))

    # --- batch tiling (batch lives on the lane axis) ------------------------
    tb_cap = _round_up(tile_b, _LANE)
    b_lane = _round_up(B, _LANE)
    # >=2 steps whenever possible so both v7x TensorCores get work; otherwise
    # just enough steps of (at most) tb_cap lanes, minimizing pad.
    n_steps = max(_cdiv(b_lane, tb_cap), 2 if b_lane > _LANE else 1)
    tb = _round_up(_cdiv(b_lane, n_steps), _LANE)
    b_pad = n_steps * tb

    # Feature-major input: (2, b_pad). Pad columns are garbage after the MLP but
    # are sliced off below — never consume rows beyond B from the padded slab.
    xt = x.T
    if b_pad != B:
        xt = jnp.pad(xt, ((0, 0), (0, b_pad - B)))

    # Weights/biases: full-array blocks with constant index_maps -> VMEM-resident.
    resident = lambda a: pl.BlockSpec(a.shape, lambda i: (0,) * a.ndim)

    # VMEM budget: x/out double buffers + h1/h2 intermediates, 2x margin,
    # clamped to [16 MiB, 48 MiB] (v7x has 64 MiB physical VMEM).
    per_step_bytes = tb * 4 * (2 * 2 + 2 * _OUT_PAD_SUB + 24 + 48)
    vmem_limit = int(min(max(2 * per_step_bytes + (4 << 20), 16 << 20), 48 << 20))

    out = pl.pallas_call(
        _policy_net_kernel,
        out_shape=jax.ShapeDtypeStruct((_OUT_PAD_SUB, b_pad), jnp.float32),
        grid=(n_steps,),
        in_specs=[
            pl.BlockSpec((2, tb), lambda i: (0, i)),      # x^T: tiled over batch lanes
            resident(w1), resident(b1),
            resident(w2), resident(b2),
            resident(w3), resident(b3),
        ],
        out_specs=pl.BlockSpec((_OUT_PAD_SUB, tb), lambda i: (0, i)),
        compiler_params=pltpu.CompilerParams(
            dimension_semantics=("parallel",),            # shard batch across TCs on v7x
            vmem_limit_bytes=vmem_limit,
        ),
    )(xt, w1, b1, w2, b2, w3, b3)

    # Slice touches only 11/16 sublanes; transpose back to torch's (B, 11).
    return out[:_OUT_TRUE, :B].T


def init_params(key):
    """Deterministic init mimicking torch.nn.Linear (uniform +-1/sqrt(fan_in)).

    Weights are stored in PyTorch's (out_features, in_features) layout; biases
    as (out, 1). fc3 is pre-padded 11 -> 16 rows with zeros ONCE here so the
    forward path does no per-call padding.
    """
    dims = [(2, 24), (24, 48), (48, _OUT_TRUE)]
    params = {}
    for i, (fan_in, fan_out) in enumerate(dims, start=1):
        key, kw, kb = jax.random.split(key, 3)
        bound = 1.0 / jnp.sqrt(jnp.float32(fan_in))
        w = jax.random.uniform(kw, (fan_out, fan_in), jnp.float32,
                               minval=-bound, maxval=bound)
        b = jax.random.uniform(kb, (fan_out, 1), jnp.float32,
                               minval=-bound, maxval=bound)
        if fan_out == _OUT_TRUE:
            w = jnp.pad(w, ((0, _OUT_PAD_SUB - _OUT_TRUE), (0, 0)))
            b = jnp.pad(b, ((0, _OUT_PAD_SUB - _OUT_TRUE), (0, 0)))
        params[f"w{i}"] = w
        params[f"b{i}"] = b
    return params


if __name__ == "__main__":
    key = jax.random.PRNGKey(0)
    kparams, kx1, kx2 = jax.random.split(key, 3)
    params = init_params(kparams)

    # Small batch forced through the kernel (single grid step, grid=(1,)).
    x_small = jax.random.normal(kx1, (8, 2), jnp.float32)
    out_small = jax.block_until_ready(
        policy_net_forward(x_small, params, min_kernel_batch=0))
    ref_small = _xla_forward(x_small, params)
    assert out_small.shape == (8, _OUT_TRUE), out_small.shape
    assert jnp.allclose(out_small, ref_small, atol=1e-5, rtol=1e-5), "mismatch (B=8, kernel)"

    # Small batch via the default XLA fallback path.
    out_fb = jax.block_until_ready(policy_net_forward(x_small, params))
    assert jnp.allclose(out_fb, ref_small, atol=1e-5, rtol=1e-5), "mismatch (B=8, fallback)"

    # Ragged batch: pad/slice path + >=2 pipelined grid steps (v7x megacore).
    x_big = jax.random.normal(kx2, (300, 2), jnp.float32)
    out_big = jax.block_until_ready(policy_net_forward(x_big, params))
    ref_big = _xla_forward(x_big, params)
    assert out_big.shape == (300, _OUT_TRUE), out_big.shape
    assert jnp.allclose(out_big, ref_big, atol=1e-5, rtol=1e-5), "mismatch (B=300)"

    print("KERNEL_OK")
</pallas_src>

<mosaic_0001>
module attributes {stable_mosaic.version = 11 : i64} {
  func.func @_policy_net_kernel(%arg0: i32, %arg1: memref<2x128xf32, #tpu.memory_space<vmem>>, %arg2: memref<24x2xf32, #tpu.memory_space<vmem>>, %arg3: memref<24x1xf32, #tpu.memory_space<vmem>>, %arg4: memref<48x24xf32, #tpu.memory_space<vmem>>, %arg5: memref<48x1xf32, #tpu.memory_space<vmem>>, %arg6: memref<16x48xf32, #tpu.memory_space<vmem>>, %arg7: memref<16x1xf32, #tpu.memory_space<vmem>>, %arg8: memref<16x128xf32, #tpu.memory_space<vmem>>) attributes {dimension_semantics = [#tpu.dimension_semantics<parallel>], iteration_bounds = array<i64: 1>, scalar_prefetch = 0 : i64, scratch_operands = 0 : i64, tpu.core_type = #tpu.core_type<tc>, window_params = [{transform_indices = @transform_0, window_bounds = array<i64: 2, 128>}, {pipeline_mode = #tpu.pipeline_mode<synchronous>, transform_indices = @transform_1, window_bounds = array<i64: 24, 2>}, {pipeline_mode = #tpu.pipeline_mode<synchronous>, transform_indices = @transform_2, window_bounds = array<i64: 24, 1>}, {pipeline_mode = #tpu.pipeline_mode<synchronous>, transform_indices = @transform_3, window_bounds = array<i64: 48, 24>}, {pipeline_mode = #tpu.pipeline_mode<synchronous>, transform_indices = @transform_4, window_bounds = array<i64: 48, 1>}, {pipeline_mode = #tpu.pipeline_mode<synchronous>, transform_indices = @transform_5, window_bounds = array<i64: 16, 48>}, {pipeline_mode = #tpu.pipeline_mode<synchronous>, transform_indices = @transform_6, window_bounds = array<i64: 16, 1>}, {transform_indices = @transform_7, window_bounds = array<i64: 16, 128>}]} {
    %c0 = arith.constant 0 : index
    %c0_0 = arith.constant 0 : index
    %0 = vector.load %arg1[%c0, %c0_0] : memref<2x128xf32, #tpu.memory_space<vmem>>, vector<2x128xf32>
    %c0_1 = arith.constant 0 : index
    %c0_2 = arith.constant 0 : index
    %1 = vector.load %arg2[%c0_1, %c0_2] : memref<24x2xf32, #tpu.memory_space<vmem>>, vector<24x1xf32>
    %2 = vector.extract_strided_slice %0 {offsets = [0, 0], sizes = [1, 128], strides = [1, 1]} : vector<2x128xf32> to vector<1x128xf32>
    %3 = vector.broadcast %1 : vector<24x1xf32> to vector<24x128xf32>
    %4 = vector.broadcast %2 : vector<1x128xf32> to vector<24x128xf32>
    %5 = arith.mulf %3, %4 : vector<24x128xf32>
    %c0_3 = arith.constant 0 : index
    %c1 = arith.constant 1 : index
    %6 = vector.load %arg2[%c0_3, %c1] : memref<24x2xf32, #tpu.memory_space<vmem>>, vector<24x1xf32>
    %7 = vector.extract_strided_slice %0 {offsets = [1, 0], sizes = [1, 128], strides = [1, 1]} : vector<2x128xf32> to vector<1x128xf32>
    %8 = vector.broadcast %6 : vector<24x1xf32> to vector<24x128xf32>
    %9 = vector.broadcast %7 : vector<1x128xf32> to vector<24x128xf32>
    %10 = arith.mulf %8, %9 : vector<24x128xf32>
    %11 = arith.addf %5, %10 : vector<24x128xf32>
    %c0_4 = arith.constant 0 : index
    %c0_5 = arith.constant 0 : index
    %12 = vector.load %arg3[%c0_4, %c0_5] : memref<24x1xf32, #tpu.memory_space<vmem>>, vector<24x1xf32>
    %13 = vector.broadcast %12 : vector<24x1xf32> to vector<24x128xf32>
    %14 = arith.addf %11, %13 : vector<24x128xf32>
    %cst = arith.constant 0.000000e+00 : f32
    %15 = vector.broadcast %cst : f32 to vector<24x128xf32>
    %16 = arith.maximumf %14, %15 : vector<24x128xf32>
    %c0_6 = arith.constant 0 : index
    %c0_7 = arith.constant 0 : index
    %17 = vector.load %arg4[%c0_6, %c0_7] : memref<48x24xf32, #tpu.memory_space<vmem>>, vector<48x24xf32>
    %cst_8 = arith.constant dense<0.000000e+00> : vector<48x128xf32>
    %18 = tpu.matmul %17, %16, %cst_8 {dimension_numbers = #tpu.dot_dimension_numbers<[1], [0], [0], [1], [0, 0, 1, 1], [], []>} : vector<48x24xf32>, vector<24x128xf32>, vector<48x128xf32> -> vector<48x128xf32>
    %c0_9 = arith.constant 0 : index
    %c0_10 = arith.constant 0 : index
    %19 = vector.load %arg5[%c0_9, %c0_10] : memref<48x1xf32, #tpu.memory_space<vmem>>, vector<48x1xf32>
    %20 = vector.broadcast %19 : vector<48x1xf32> to vector<48x128xf32>
    %21 = arith.addf %18, %20 : vector<48x128xf32>
    %cst_11 = arith.constant 0.000000e+00 : f32
    %22 = vector.broadcast %cst_11 : f32 to vector<48x128xf32>
    %23 = arith.maximumf %21, %22 : vector<48x128xf32>
    %c0_12 = arith.constant 0 : index
    %c0_13 = arith.constant 0 : index
    %24 = vector.load %arg6[%c0_12, %c0_13] : memref<16x48xf32, #tpu.memory_space<vmem>>, vector<16x48xf32>
    %cst_14 = arith.constant dense<0.000000e+00> : vector<16x128xf32>
    %25 = tpu.matmul %24, %23, %cst_14 {dimension_numbers = #tpu.dot_dimension_numbers<[1], [0], [0], [1], [0, 0, 1, 1], [], []>} : vector<16x48xf32>, vector<48x128xf32>, vector<16x128xf32> -> vector<16x128xf32>
    %c0_15 = arith.constant 0 : index
    %c0_16 = arith.constant 0 : index
    %26 = vector.load %arg7[%c0_15, %c0_16] : memref<16x1xf32, #tpu.memory_space<vmem>>, vector<16x1xf32>
    %27 = vector.broadcast %26 : vector<16x1xf32> to vector<16x128xf32>
    %28 = arith.addf %25, %27 : vector<16x128xf32>
    %c0_17 = arith.constant 0 : index
    %c0_18 = arith.constant 0 : index
    %29 = vector.load %arg8[%c0_17, %c0_18] : memref<16x128xf32, #tpu.memory_space<vmem>>, vector<16x128xf32>
    tpu.vector_store %arg8[%c0_17, %c0_18], %28 {strides = array<i32>} : memref<16x128xf32, #tpu.memory_space<vmem>>, vector<16x128xf32>,
    return
  }
  func.func @transform_0(%arg0: i32) -> (i32, i32) {
    %c0_i32 = arith.constant 0 : i32
    %c0_i32_0 = arith.constant 0 : i32
    return %c0_i32, %arg0 : i32, i32
  }
  func.func @transform_1(%arg0: i32) -> (i32, i32) {
    %c0_i32 = arith.constant 0 : i32
    %c0_i32_0 = arith.constant 0 : i32
    %c0_i32_1 = arith.constant 0 : i32
    return %c0_i32, %c0_i32_0 : i32, i32
  }
  func.func @transform_2(%arg0: i32) -> (i32, i32) {
    %c0_i32 = arith.constant 0 : i32
    %c0_i32_0 = arith.constant 0 : i32
    %c0_i32_1 = arith.constant 0 : i32
    return %c0_i32, %c0_i32_0 : i32, i32
  }
  func.func @transform_3(%arg0: i32) -> (i32, i32) {
    %c0_i32 = arith.constant 0 : i32
    %c0_i32_0 = arith.constant 0 : i32
    %c0_i32_1 = arith.constant 0 : i32
    return %c0_i32, %c0_i32_0 : i32, i32
  }
  func.func @transform_4(%arg0: i32) -> (i32, i32) {
    %c0_i32 = arith.constant 0 : i32
    %c0_i32_0 = arith.constant 0 : i32
    %c0_i32_1 = arith.constant 0 : i32
    return %c0_i32, %c0_i32_0 : i32, i32
  }
  func.func @transform_5(%arg0: i32) -> (i32, i32) {
    %c0_i32 = arith.constant 0 : i32
    %c0_i32_0 = arith.constant 0 : i32
    %c0_i32_1 = arith.constant 0 : i32
    return %c0_i32, %c0_i32_0 : i32, i32
  }
  func.func @transform_6(%arg0: i32) -> (i32, i32) {
    %c0_i32 = arith.constant 0 : i32
    %c0_i32_0 = arith.constant 0 : i32
    %c0_i32_1 = arith.constant 0 : i32
    return %c0_i32, %c0_i32_0 : i32, i32
  }
  func.func @transform_7(%arg0: i32) -> (i32, i32) {
    %c0_i32 = arith.constant 0 : i32
    %c0_i32_0 = arith.constant 0 : i32
    return %c0_i32, %arg0 : i32, i32
  }
}

</mosaic_0001>

<llo_original>
// kernel: tpu_custom_call.1
$region0: #{tpu_custom_call.1}
  #allocation0 [shape = 'u32[]', space=smem, size = 0x4, offset = 0x4, fixed_abs, tag = 'smem constant byte address 0x4 - core index']
  #allocation1 [shape = 'u32[144,128]{1,0:T(1,128)}', space=vmem, size = 0x12000, scoped, tag = 'internal scratch']
  %s0 = inlined_call_operand.vmem [shape: f32[2,128], index: 0, kind: input, shape index: {}]
  %s1 = inlined_call_operand.vmem [shape: f32[24,2], index: 1, kind: input, shape index: {}]
  %s2 = inlined_call_operand.vmem [shape: f32[24,1], index: 2, kind: input, shape index: {}]
  %s3 = inlined_call_operand.vmem [shape: f32[48,24], index: 3, kind: input, shape index: {}]
  %s4 = inlined_call_operand.vmem [shape: f32[48,1], index: 4, kind: input, shape index: {}]
  %s5 = inlined_call_operand.vmem [shape: f32[16,48], index: 5, kind: input, shape index: {}]
  %s6 = inlined_call_operand.vmem [shape: f32[16,1], index: 6, kind: input, shape index: {}]
  %s7 = inlined_call_operand.hbm [shape: f32[16,128], index: 7, kind: output, shape index: {}]
  %s8 = sld [smem:[#allocation0]]
  $region38: #{tpu_custom_call.1} parent=0
    _
  %s10 = ssub.s32 1, %s8
  %s11 = scalar_select 0, %s10, %s8
  $region1: #{tpu_custom_call.1} parent=0
    #allocation2 [shape = 'u8[8192]{0}', space=vmem, size = 0x2000, scoped, tag = 'output window, operand 0, single buffered']
    #allocation3 [shape = 's32[1]{0}', space=sflag, size = 0x4, scoped, tag = 'scoped memory for tpu_custom_call.1']
    %12 = vsyncpa [#allocation3], 0
    // Predicated region
    $region2: #{tpu_custom_call.1} parent=1 // pred_check
      _
    $region3: #{tpu_custom_call.1} parent=1 // pred_check_branch
      %14 = sbr.rel (0) target = $region5
    $region4: #{tpu_custom_call.1} parent=1 // pred_region
      _
    $region5: #{tpu_custom_call.1} parent=1 // pred_fallthru
      _
    // Predicated region
    $region6: #{tpu_custom_call.1} parent=1 // pred_check
      _
    $region7: #{tpu_custom_call.1} parent=1 // pred_check_branch
      %16 = sbr.rel (0) target = $region9
    $region8: #{tpu_custom_call.1} parent=1 // pred_region
      _
    $region9: #{tpu_custom_call.1} parent=1 // pred_fallthru
      _
    // Predicated region
    $region10: #{tpu_custom_call.1} parent=1 // pred_check
      _
    $region11: #{tpu_custom_call.1} parent=1 // pred_check_branch
      %18 = sbr.rel (0) target = $region13
    $region12: #{tpu_custom_call.1} parent=1 // pred_region
      _
    $region13: #{tpu_custom_call.1} parent=1 // pred_fallthru
      _
    // Predicated region
    $region14: #{tpu_custom_call.1} parent=1 // pred_check
      _
    $region15: #{tpu_custom_call.1} parent=1 // pred_check_branch
      %20 = sbr.rel (0) target = $region17
    $region16: #{tpu_custom_call.1} parent=1 // pred_region
      _
    $region17: #{tpu_custom_call.1} parent=1 // pred_fallthru
      _
    // Predicated region
    $region18: #{tpu_custom_call.1} parent=1 // pred_check
      _
    $region19: #{tpu_custom_call.1} parent=1 // pred_check_branch
      %22 = sbr.rel (0) target = $region21
    $region20: #{tpu_custom_call.1} parent=1 // pred_region
      _
    $region21: #{tpu_custom_call.1} parent=1 // pred_fallthru
      _
    // Predicated region
    $region22: #{tpu_custom_call.1} parent=1 // pred_check
      _
    $region23: #{tpu_custom_call.1} parent=1 // pred_check_branch
      %24 = sbr.rel (0) target = $region25
    $region24: #{tpu_custom_call.1} parent=1 // pred_region
      _
    $region25: #{tpu_custom_call.1} parent=1 // pred_fallthru
      _
    // Predicated region
    $region26: #{tpu_custom_call.1} parent=1 // pred_check
      _
    $region27: #{tpu_custom_call.1} parent=1 // pred_check_branch
      %26 = sbr.rel (0) target = $region29
    $region28: #{tpu_custom_call.1} parent=1 // pred_region
      _
    $region29: #{tpu_custom_call.1} parent=1 // pred_fallthru
      _
    %v27 = vld [vmem:[%s0] sm:$0x3]
    %v28 = vld [vmem:[%s1] sm:$0xff]
    %v29 = vld [vmem:[%s1 + $0x8] sm:$0xff]
    %v30 = vld [vmem:[%s1 + $0x10] sm:$0xff]
    %32 = vset.pattern.permute.xlu0 0
    %33 = vperm.xlu0 %32, %v28
    %v34 = vpop.permute.xlu0 %33
    %37 = vset.pattern.permute.xlu0 0
    %38 = vperm.xlu0 %37, %v29
    %v39 = vpop.permute.xlu0 %38
    %42 = vset.pattern.permute.xlu0 0
    %43 = vperm.xlu0 %42, %v30
    %v44 = vpop.permute.xlu0 %43
    %v46 = vlaneseq
    %v47 = vshrl.u32 %v46, 7
    %v48 = vsub.s32 0, %v47
    %v49 = vrot.slane %v27, %v48
    %v50 = vmul.f32 %v34, %v49
    %v51 = vmul.f32 %v39, %v49
    %v52 = vmul.f32 %v44, %v49
    %53 = vset.pattern.permute.xlu0 1
    %54 = vperm.xlu0 %53, %v28
    %v55 = vpop.permute.xlu0 %54
    %57 = vset.pattern.permute.xlu0 1
    %58 = vperm.xlu0 %57, %v29
    %v59 = vpop.permute.xlu0 %58
    %61 = vset.pattern.permute.xlu0 1
    %62 = vperm.xlu0 %61, %v30
    %v63 = vpop.permute.xlu0 %62
    %v65 = vlaneseq
    %v66 = vshrl.u32 %v65, 7
    %v67 = vsub.s32 1, %v66
    %v68 = vrot.slane %v27, %v67
    %v69 = vmul.f32 %v55, %v68
    %v70 = vmul.f32 %v59, %v68
    %v71 = vmul.f32 %v63, %v68
    %v72 = vadd.f32 %v50, %v69
    %v73 = vadd.f32 %v51, %v70
    %v74 = vadd.f32 %v52, %v71
    %v75 = vld [vmem:[%s2] sm:$0xff]
    %v76 = vld [vmem:[%s2 + $0x8] sm:$0xff]
    %v77 = vld [vmem:[%s2 + $0x10] sm:$0xff]
    %79 = vset.pattern.permute.xlu0 0
    %80 = vperm.xlu0 %79, %v75
    %v81 = vpop.permute.xlu0 %80
    %84 = vset.pattern.permute.xlu0 0
    %85 = vperm.xlu0 %84, %v76
    %v86 = vpop.permute.xlu0 %85
    %89 = vset.pattern.permute.xlu0 0
    %90 = vperm.xlu0 %89, %v77
    %v91 = vpop.permute.xlu0 %90
    %v93 = vadd.f32 %v72, %v81
    %v94 = vadd.f32 %v73, %v86
    %v95 = vadd.f32 %v74, %v91
    %v96 = vmax.f32 %v93, 0.0
    %v97 = vmax.f32 %v94, 0.0
    %v98 = vmax.f32 %v95, 0.0
    %v99 = vld [vmem:[%s3] sm:$0xff]
    %v100 = vld [vmem:[%s3 + $0x8] sm:$0xff]
    %v101 = vld [vmem:[%s3 + $0x10] sm:$0xff]
    %v102 = vld [vmem:[%s3 + $0x18] sm:$0xff]
    %v103 = vld [vmem:[%s3 + $0x20] sm:$0xff]
    %v104 = vld [vmem:[%s3 + $0x28] sm:$0xff]
    %v105 = vld [vmem:[%s4] sm:$0xff]
    %v106 = vld [vmem:[%s4 + $0x8] sm:$0xff]
    %v107 = vld [vmem:[%s4 + $0x10] sm:$0xff]
    %v108 = vld [vmem:[%s4 + $0x18] sm:$0xff]
    %v109 = vld [vmem:[%s4 + $0x20] sm:$0xff]
    %v110 = vld [vmem:[%s4 + $0x28] sm:$0xff]
    %112 = vset.pattern.permute.xlu0 0
    %113 = vperm.xlu0 %112, %v105
    %v114 = vpop.permute.xlu0 %113
    %117 = vset.pattern.permute.xlu0 0
    %118 = vperm.xlu0 %117, %v106
    %v119 = vpop.permute.xlu0 %118
    %122 = vset.pattern.permute.xlu0 0
    %123 = vperm.xlu0 %122, %v107
    %v124 = vpop.permute.xlu0 %123
    %127 = vset.pattern.permute.xlu0 0
    %128 = vperm.xlu0 %127, %v108
    %v129 = vpop.permute.xlu0 %128
    %132 = vset.pattern.permute.xlu0 0
    %133 = vperm.xlu0 %132, %v109
    %v134 = vpop.permute.xlu0 %133
    %137 = vset.pattern.permute.xlu0 0
    %138 = vperm.xlu0 %137, %v110
    %v139 = vpop.permute.xlu0 %138
    %vm141 = vcmask 195584
    %v143 = vsel %vm141, %v99, 0
    %v146 = vsel %vm141, %v100, 0
    %v149 = vsel %vm141, %v101, 0
    %v152 = vsel %vm141, %v102, 0
    %v155 = vsel %vm141, %v103, 0
    %v158 = vsel %vm141, %v104, 0
    %160 = vmatprep.subr.mxu0 0.0
    %161 = vmatpush1.msra.mxu0 0.0
    %162 = vmatprep.subr.mxu0 0.0
    %163 = vmatpush1.msra.mxu0 0.0
    %164 = vmatprep.subr.mxu0 0.0
    %165 = vmatpush1.msra.mxu0 0.0
    %166 = vmatprep.subr.mxu0 0.0
    %167 = vmatpush1.msra.mxu0 0.0
    %168 = vmatprep.subr.mxu0 0.0
    %169 = vmatpush1.msra.mxu0 0.0
    %170 = vmatprep.subr.mxu0 0.0
    %171 = vmatpush1.msra.mxu0 0.0
    %172 = vmatprep.subr.mxu0 0.0
    %173 = vmatpush1.msra.mxu0 0.0
    %174 = vmatprep.subr.mxu0 0.0
    %175 = vmatpush1.msra.mxu0 0.0
    %176 = vmatprep.subr.mxu0 0.0
    %177 = vmatpush1.msra.mxu0 0.0
    %178 = vmatprep.subr.mxu0 0.0
    %179 = vmatpush1.msra.mxu0 0.0
    %180 = vmatprep.subr.mxu0 0.0
    %181 = vmatpush1.msra.mxu0 0.0
    %182 = vmatprep.subr.mxu0 0.0
    %183 = vmatpush1.msra.mxu0 0.0
    %184 = vmatprep.subr.mxu0 0.0
    %185 = vmatpush1.msra.mxu0 0.0
    %186 = vmatprep.subr.mxu0 0.0
    %187 = vmatpush1.msra.mxu0 %v98
    %188 = vmatprep.subr.mxu0 0.0
    %189 = vmatpush1.msra.mxu0 %v97
    %190 = vmatprep.subr.mxu0 0.0
    %191 = vmatpush1.msra.mxu0 %v96
    %192 = vmatprep.subr.mxu0 0.0
    %193 = vmatpush2.msra.mxu0 0.0
    %194 = vmatprep.subr.mxu0 0.0
    %195 = vmatpush2.msra.mxu0 0.0
    %196 = vmatprep.subr.mxu0 0.0
    %197 = vmatpush2.msra.mxu0 0.0
    %198 = vmatprep.subr.mxu0 0.0
    %199 = vmatpush2.msra.mxu0 0.0
    %200 = vmatprep.subr.mxu0 0.0
    %201 = vmatpush2.msra.mxu0 0.0
    %202 = vmatprep.subr.mxu0 0.0
    %203 = vmatpush2.msra.mxu0 0.0
    %204 = vmatprep.subr.mxu0 0.0
    %205 = vmatpush2.msra.mxu0 0.0
    %206 = vmatprep.subr.mxu0 0.0
    %207 = vmatpush2.msra.mxu0 0.0
    %208 = vmatprep.subr.mxu0 0.0
    %209 = vmatpush2.msra.mxu0 0.0
    %210 = vmatprep.subr.mxu0 0.0
    %211 = vmatpush2.msra.mxu0 0.0
    %212 = vmatprep.subr.mxu0 0.0
    %213 = vmatpush2.msra.mxu0 0.0
    %214 = vmatprep.subr.mxu0 0.0
    %215 = vmatpush2.msra.mxu0 0.0
    %216 = vmatprep.subr.mxu0 0.0
    %217 = vmatpush2.msra.mxu0 0.0
    %218 = vmatprep.subr.mxu0 0.0
    %219 = vmatpush2.msra.mxu0 0.0
    %220 = vmatprep.subr.mxu0 0.0
    %221 = vmatpush2.msra.mxu0 0.0
    %222 = vmatprep.subr.mxu0 0.0
    %223 = vmatpush2.msra.mxu0 0.0
    %224 = vmatprep.mubr.f32.mxu0 0.0
    %225 = vmatmul.mubr.f32.gmra.mxu0 %v143
    %v226 = vpop.f32.mrf.mxu0
    %v227 = vadd.f32 %v114, %v226
    %v228 = vpop.f32.mrf.mxu0
    %229 = vmatprep.mubr.f32.mxu0 0.0
    %230 = vmatmul.mubr.f32.gmra.mxu0 %v146
    %v231 = vpop.f32.mrf.mxu0
    %v232 = vadd.f32 %v119, %v231
    %v233 = vpop.f32.mrf.mxu0
    %234 = vmatprep.mubr.f32.mxu0 0.0
    %235 = vmatmul.mubr.f32.gmra.mxu0 %v149
    %v236 = vpop.f32.mrf.mxu0
    %v237 = vadd.f32 %v124, %v236
    %v238 = vpop.f32.mrf.mxu0
    %239 = vmatprep.mubr.f32.mxu0 0.0
    %240 = vmatmul.mubr.f32.gmra.mxu0 %v152
    %v241 = vpop.f32.mrf.mxu0
    %v242 = vadd.f32 %v129, %v241
    %v243 = vpop.f32.mrf.mxu0
    %244 = vmatprep.mubr.f32.mxu0 0.0
    %245 = vmatmul.mubr.f32.gmra.mxu0 %v155
    %v246 = vpop.f32.mrf.mxu0
    %v247 = vadd.f32 %v134, %v246
    %v248 = vpop.f32.mrf.mxu0
    %249 = vmatprep.mubr.f32.mxu0 0.0
    %250 = vmatmul.mubr.f32.gmra.mxu0 %v158
    %v251 = vpop.f32.mrf.mxu0
    %v252 = vadd.f32 %v139, %v251
    %v253 = vpop.f32.mrf.mxu0
    %254 = vdwg.mxu0
    %v255 = vmax.f32 %v227, 0.0
    %v256 = vmax.f32 %v232, 0.0
    %v257 = vmax.f32 %v237, 0.0
    %v258 = vmax.f32 %v242, 0.0
    %v259 = vmax.f32 %v247, 0.0
    %v260 = vmax.f32 %v252, 0.0
    %v261 = vld [vmem:[%s5] sm:$0xff]
    %v262 = vld [vmem:[%s5 + $0x8] sm:$0xff]
    %v263 = vld [vmem:[%s6] sm:$0xff]
    %v264 = vld [vmem:[%s6 + $0x8] sm:$0xff]
    %266 = vset.pattern.permute.xlu0 0
    %267 = vperm.xlu0 %266, %v263
    %v268 = vpop.permute.xlu0 %267
    %271 = vset.pattern.permute.xlu0 0
    %272 = vperm.xlu0 %271, %v264
    %v273 = vpop.permute.xlu0 %272
    %vm275 = vcmask 392192
    %v277 = vsel %vm275, %v261, 0
    %v280 = vsel %vm275, %v262, 0
    %282 = vmatprep.subr.mxu0 0.0
    %283 = vmatpush1.msra.mxu0 0.0
    %284 = vmatprep.subr.mxu0 0.0
    %285 = vmatpush1.msra.mxu0 0.0
    %286 = vmatprep.subr.mxu0 0.0
    %287 = vmatpush1.msra.mxu0 0.0
    %288 = vmatprep.subr.mxu0 0.0
    %289 = vmatpush1.msra.mxu0 0.0
    %290 = vmatprep.subr.mxu0 0.0
    %291 = vmatpush1.msra.mxu0 0.0
    %292 = vmatprep.subr.mxu0 0.0
    %293 = vmatpush1.msra.mxu0 0.0
    %294 = vmatprep.subr.mxu0 0.0
    %295 = vmatpush1.msra.mxu0 0.0
    %296 = vmatprep.subr.mxu0 0.0
    %297 = vmatpush1.msra.mxu0 0.0
    %298 = vmatprep.subr.mxu0 0.0
    %299 = vmatpush1.msra.mxu0 0.0
    %300 = vmatprep.subr.mxu0 0.0
    %301 = vmatpush1.msra.mxu0 0.0
    %302 = vmatprep.subr.mxu0 0.0
    %303 = vmatpush1.msra.mxu0 %v260
    %304 = vmatprep.subr.mxu0 0.0
    %305 = vmatpush1.msra.mxu0 %v259
    %306 = vmatprep.subr.mxu0 0.0
    %307 = vmatpush1.msra.mxu0 %v258
    %308 = vmatprep.subr.mxu0 0.0
    %309 = vmatpush1.msra.mxu0 %v257
    %310 = vmatprep.subr.mxu0 0.0
    %311 = vmatpush1.msra.mxu0 %v256
    %312 = vmatprep.subr.mxu0 0.0
    %313 = vmatpush1.msra.mxu0 %v255
    %314 = vmatprep.subr.mxu0 0.0
    %315 = vmatpush2.msra.mxu0 0.0
    %316 = vmatprep.subr.mxu0 0.0
    %317 = vmatpush2.msra.mxu0 0.0
    %318 = vmatprep.subr.mxu0 0.0
    %319 = vmatpush2.msra.mxu0 0.0
    %320 = vmatprep.subr.mxu0 0.0
    %321 = vmatpush2.msra.mxu0 0.0
    %322 = vmatprep.subr.mxu0 0.0
    %323 = vmatpush2.msra.mxu0 0.0
    %324 = vmatprep.subr.mxu0 0.0
    %325 = vmatpush2.msra.mxu0 0.0
    %326 = vmatprep.subr.mxu0 0.0
    %327 = vmatpush2.msra.mxu0 0.0
    %328 = vmatprep.subr.mxu0 0.0
    %329 = vmatpush2.msra.mxu0 0.0
    %330 = vmatprep.subr.mxu0 0.0
    %331 = vmatpush2.msra.mxu0 0.0
    %332 = vmatprep.subr.mxu0 0.0
    %333 = vmatpush2.msra.mxu0 0.0
    %334 = vmatprep.subr.mxu0 0.0
    %335 = vmatpush2.msra.mxu0 0.0
    %336 = vmatprep.subr.mxu0 0.0
    %337 = vmatpush2.msra.mxu0 0.0
    %338 = vmatprep.subr.mxu0 0.0
    %339 = vmatpush2.msra.mxu0 0.0
    %340 = vmatprep.subr.mxu0 0.0
    %341 = vmatpush2.msra.mxu0 0.0
    %342 = vmatprep.subr.mxu0 0.0
    %343 = vmatpush2.msra.mxu0 0.0
    %344 = vmatprep.subr.mxu0 0.0
    %345 = vmatpush2.msra.mxu0 0.0
    %346 = vmatprep.mubr.f32.mxu0 0.0
    %347 = vmatmul.mubr.f32.gmra.mxu0 %v277
    %v348 = vpop.f32.mrf.mxu0
    %v349 = vadd.f32 %v268, %v348
    %v350 = vpop.f32.mrf.mxu0
    %351 = vmatprep.mubr.f32.mxu0 0.0
    %352 = vmatmul.mubr.f32.gmra.mxu0 %v280
    %v353 = vpop.f32.mrf.mxu0
    %v354 = vadd.f32 %v273, %v353
    %v355 = vpop.f32.mrf.mxu0
    %356 = vdwg.mxu0
    %357 = vst [vmem:[#allocation2] sm:$0xff] %v349
    %358 = vst [vmem:[#allocation2 + $0x8] sm:$0xff] %v354
    // Predicated region
    $region30: #{tpu_custom_call.1} parent=1 // pred_check
      _
    $region31: #{tpu_custom_call.1} parent=1 // pred_check_branch
      %360 = sbr.rel (0) target = $region33
    $region32: #{tpu_custom_call.1} parent=1 // pred_region
      %s362 = ssub.s32 256, 256
      %363 = vsyncadd [#allocation3], %s362
      %s364 = sshll.u32 [#allocation2], 4
      %s365 = int_to_ptr.vmem [resolvable:$true] %s364
      %370 = dma.vmem_to_hbm [thread:$0]  %s365, 256, %s7, [#allocation3], 128, 128, 8
    $region33: #{tpu_custom_call.1} parent=1 // pred_fallthru
      _
    // Predicated region
    $region34: #{tpu_custom_call.1} parent=1 // pred_check
      _
    $region35: #{tpu_custom_call.1} parent=1 // pred_check_branch
      %372 = sbr.rel (0) target = $region37
    $region36: #{tpu_custom_call.1} parent=1 // pred_region
      %373 = dma.done [#allocation3], 256
    $region37: #{tpu_custom_call.1} parent=1 // pred_fallthru
      _
    %374 = vsyncpa [#allocation3], 1

</llo_original>
